<compile_context>
chip_gen: v5e
topology: v5e:2x2
jax: 0.10.0
libtpu: 0.0.40
codegen_flags: <defaults>
</compile_context>

<pallas_src>
import jax
import jax.numpy as jnp
from jax.experimental import pallas as pl
from jax.experimental.pallas import tpu as pltpu


# ----------------------------- Pallas kernels -------------------------------

def _stage1_kernel(feat_ref, w1_ref, b1_ref, wg_ref, bg_ref,
                   logit_ref, cft_ref):
    # feat: (1, Cin, HWT) bf16 ; w1: (C, Cin) bf16 (BN folded) ; b1: (C, 1) f32
    # wg: (K, C) bf16 ; bg: (K, 1) f32
    # outputs: cond_logit tile (1, K, HWT) f32 ; cf^T accumulator (1, C, K) f32
    t = pl.program_id(1)

    # fused 1x1 conv + folded BatchNorm + ReLU (bf16 operands, f32 MXU accumulate).
    # Dropout2d is identity at inference.
    x = jnp.dot(w1_ref[...], feat_ref[0],
                preferred_element_type=jnp.float32) + b1_ref[...]
    x = jnp.maximum(x, 0.0)                                  # (C, HWT) f32
    x16 = x.astype(jnp.bfloat16)

    # guidance_project 1x1 conv -> cond_logit tile
    g = jnp.dot(wg_ref[...], x16,
                preferred_element_type=jnp.float32) + bg_ref[...]
    logit_ref[0] = g                                         # (K, HWT) f32

    # channel softmax in f32; divide goes to the EUP (approx reciprocal).
    gmax = jnp.max(g, axis=0, keepdims=True)
    e = jnp.exp(g - gmax)
    gm = e * pl.reciprocal(jnp.sum(e, axis=0, keepdims=True), approx=True)
    gm16 = gm.astype(jnp.bfloat16)

    # cond_filters^T accumulation over HW:  cf^T (C, K) += x @ gm^T.
    # The rhs (gm, only K rows) is the operand that gets transposed.
    contrib = jax.lax.dot_general(
        x16, gm16, (((1,), (1,)), ((), ())),
        preferred_element_type=jnp.float32)                  # (C, K)

    @pl.when(t == 0)
    def _init():
        cft_ref[...] = jnp.zeros_like(cft_ref)

    cft_ref[0] = cft_ref[0] + contrib


def _stage2_kernel(feat_ref, w1_ref, b1_ref, dw_ref, db_ref, seg_ref):
    # Recompute the cheap fused conv/BN/ReLU tile instead of round-tripping x via HBM.
    x = jnp.dot(w1_ref[...], feat_ref[0],
                preferred_element_type=jnp.float32) + b1_ref[...]
    x16 = jnp.maximum(x, 0.0).astype(jnp.bfloat16)           # (C, HWT) bf16
    # per-sample dynamic 1x1 conv (the grouped F.conv2d in the reference)
    seg_ref[0] = jnp.dot(dw_ref[0], x16,
                         preferred_element_type=jnp.float32) + db_ref[0]


# ------------------------------- helpers --------------------------------------

def _pick_hw_tile(hw, target=2048):
    """Largest lane-dense HW tile (multiple of 128) dividing HW, capped at `target`."""
    if hw <= target:
        return hw
    for t in range(target - target % 128, 127, -128):
        if hw % t == 0:
            return t
    return hw  # fallback: no tiling (correctness first)


def _vmem_limit_bytes(block_bytes):
    """Double-buffered pipeline blocks + headroom, clamped to 3/4 of physical VMEM."""
    try:
        cap = int(pltpu.get_tpu_info().vmem_capacity_bytes)
    except Exception:
        cap = 64 << 20  # conservative (v7x physical VMEM)
    est = 2 * block_bytes + (8 << 20)
    return int(min(max(est, 32 << 20), cap * 3 // 4))


# ------------------------------- wrappers --------------------------------------

def cond_head_stage1(feat16, w1_16, b1, wg16, bg, hw_tile):
    B, Cin, HW = feat16.shape
    C = w1_16.shape[0]
    K = wg16.shape[0]
    n_hw = HW // hw_tile
    block_bytes = (Cin * hw_tile * 2 + C * Cin * 2 + C * 4 + K * C * 2 + K * 4
                   + K * hw_tile * 4 + C * K * 4)
    return pl.pallas_call(
        _stage1_kernel,
        out_shape=(
            jax.ShapeDtypeStruct((B, K, HW), jnp.float32),   # cond_logit
            jax.ShapeDtypeStruct((B, C, K), jnp.float32),    # cond_filters^T (pre 1/HW)
        ),
        grid_spec=pltpu.PrefetchScalarGridSpec(
            num_scalar_prefetch=0,
            grid=(B, n_hw),                                  # HW (reduction) axis last
            in_specs=[
                pl.BlockSpec((1, Cin, hw_tile), lambda b, t: (b, 0, t)),
                # weights / biases: constant block index -> DMA'd once, stay resident.
                pl.BlockSpec((C, Cin), lambda b, t: (0, 0)),
                pl.BlockSpec((C, 1), lambda b, t: (0, 0)),
                pl.BlockSpec((K, C), lambda b, t: (0, 0)),
                pl.BlockSpec((K, 1), lambda b, t: (0, 0)),
            ],
            out_specs=[
                pl.BlockSpec((1, K, hw_tile), lambda b, t: (b, 0, t)),
                pl.BlockSpec((1, C, K), lambda b, t: (b, 0, 0)),   # VMEM-resident acc
            ],
        ),
        compiler_params=pltpu.CompilerParams(
            dimension_semantics=("parallel", "arbitrary"),
            vmem_limit_bytes=_vmem_limit_bytes(block_bytes)),
    )(feat16, w1_16, b1, wg16, bg)


def cond_head_stage2(feat16, w1_16, b1, dyn_w16, dyn_b, hw_tile):
    B, Cin, HW = feat16.shape
    C = w1_16.shape[0]
    K = dyn_w16.shape[1]
    n_hw = HW // hw_tile
    block_bytes = (Cin * hw_tile * 2 + C * Cin * 2 + C * 4 + K * C * 2 + K * 4
                   + K * hw_tile * 4)
    return pl.pallas_call(
        _stage2_kernel,
        out_shape=jax.ShapeDtypeStruct((B, K, HW), jnp.float32),
        grid_spec=pltpu.PrefetchScalarGridSpec(
            num_scalar_prefetch=0,
            grid=(B, n_hw),
            in_specs=[
                pl.BlockSpec((1, Cin, hw_tile), lambda b, t: (b, 0, t)),
                pl.BlockSpec((C, Cin), lambda b, t: (0, 0)),
                pl.BlockSpec((C, 1), lambda b, t: (0, 0)),
                pl.BlockSpec((1, K, C), lambda b, t: (b, 0, 0)),
                pl.BlockSpec((1, K, 1), lambda b, t: (b, 0, 0)),
            ],
            out_specs=pl.BlockSpec((1, K, hw_tile), lambda b, t: (b, 0, t)),
        ),
        compiler_params=pltpu.CompilerParams(
            dimension_semantics=("parallel", "parallel"),
            vmem_limit_bytes=_vmem_limit_bytes(block_bytes)),
    )(feat16, w1_16, b1, dyn_w16, dyn_b)


def segmentation_cond_head(feat_nchw, params, hw_tile_target=2048):
    """Full forward.  feat_nchw: (B, Cin, H, W).  Returns [cond_logit, seg_logit],
    both (B, num_classes, H, W)."""
    B, Cin, H, W = feat_nchw.shape
    HW = H * W
    C = params["w1"].shape[0]
    K = params["wg"].shape[0]
    hw_tile = _pick_hw_tile(HW, hw_tile_target)

    feat16 = feat_nchw.reshape(B, Cin, HW).astype(jnp.bfloat16)
    w1_16 = params["w1"].astype(jnp.bfloat16)
    wg16 = params["wg"].astype(jnp.bfloat16)

    cond_logit, cft = cond_head_stage1(
        feat16, w1_16, params["b1"], wg16, params["bg"], hw_tile)
    cf = jnp.swapaxes(cft, 1, 2) / float(HW)                       # (B, K, C)

    # --- filter_project: grouped 1x1 conv on (B, K*C, 1, 1) + the exact PyTorch
    # group-major split/reshape quirk (biases of earlier groups mix into dyn_w).
    # Tiny ((B, K*(C+1)) values) -> plain-JAX glue, f32.
    fp_w_g = params["fp_w"].reshape(K, C + 1, C)                   # group g: (C+1, C)
    fp_b_g = params["fp_b"].reshape(K, C + 1)
    fp_out = jnp.einsum("bkc,kjc->bkj", cf, fp_w_g) + fp_b_g[None]  # (B, K, C+1)
    fp_flat = fp_out.reshape(B, K * (C + 1))
    dyn_w = fp_flat[:, : K * C].reshape(B, K, C)
    dyn_b = fp_flat[:, K * C:].reshape(B, K, 1)

    seg_logit = cond_head_stage2(
        feat16, w1_16, params["b1"], dyn_w.astype(jnp.bfloat16), dyn_b, hw_tile)

    # upsampling == 1 -> Identity ; activation == None -> Identity
    return [cond_logit.reshape(B, K, H, W), seg_logit.reshape(B, K, H, W)]


# ------------------------- deterministic parameters ---------------------------

def make_params(in_channels, num_classes, key):
    C = in_channels // 2
    K = num_classes
    ks = jax.random.split(key, 6)
    conv1_w = 0.1 * jax.random.normal(ks[0], (C, in_channels), jnp.float32)  # 1x1, no bias
    # BatchNorm2d(C) running stats / affine params (deterministic, non-trivial)
    gamma = 1.0 + 0.1 * jnp.arange(C, dtype=jnp.float32)
    beta = 0.05 * jnp.arange(C, dtype=jnp.float32)
    r_mean = 0.01 * jnp.arange(C, dtype=jnp.float32)
    r_var = 1.0 + 0.02 * jnp.arange(C, dtype=jnp.float32)
    eps = 1e-5
    scale = gamma / jnp.sqrt(r_var + eps)
    w1 = conv1_w * scale[:, None]                               # BN folded into conv
    b1 = (beta - r_mean * scale)[:, None]                       # (C, 1)

    wg = 0.1 * jax.random.normal(ks[1], (K, C), jnp.float32)    # guidance_project
    bg = 0.1 * jax.random.normal(ks[2], (K, 1), jnp.float32)
    fp_w = 0.1 * jax.random.normal(ks[3], (K * (C + 1), C), jnp.float32)  # filter_project
    fp_b = 0.1 * jax.random.normal(ks[4], (K * (C + 1),), jnp.float32)
    return dict(w1=w1, b1=b1, wg=wg, bg=bg, fp_w=fp_w, fp_b=fp_b)


# ------------------------------ plain-JAX reference ----------------------------

def reference(feat_nchw, params):
    """Mirrors the kernel's precision policy: matmul operands rounded to bf16,
    f32 accumulation / softmax / filter_project (the only unmirrored difference is
    the kernel's approx EUP reciprocal in the softmax, covered by the tolerance)."""
    def r16(a):
        return a.astype(jnp.bfloat16).astype(jnp.float32)

    B, Cin, H, W = feat_nchw.shape
    HW = H * W
    C = params["w1"].shape[0]
    K = params["wg"].shape[0]
    feat = r16(feat_nchw.reshape(B, Cin, HW))
    w1 = r16(params["w1"])
    wg = r16(params["wg"])

    x = jnp.maximum(jnp.einsum("ci,biw->bcw", w1, feat) + params["b1"][None], 0.0)
    x16 = r16(x)
    g = jnp.einsum("kc,bcw->bkw", wg, x16) + params["bg"][None]
    gm = jax.nn.softmax(g, axis=1)
    cf = jnp.einsum("bkw,bcw->bkc", r16(gm), x16) / float(HW)

    # grouped 1x1 conv, computed directly from PyTorch's channel/group layout
    cf_flat = cf.reshape(B, K * C)
    o = jnp.arange(K * (C + 1))
    grp = o // (C + 1)
    gathered = cf_flat[:, (grp[:, None] * C + jnp.arange(C)[None, :])]   # (B, K*(C+1), C)
    fp_out = jnp.einsum("boc,oc->bo", gathered, params["fp_w"]) + params["fp_b"]

    dyn_w = fp_out[:, : K * C].reshape(B, K, C)
    dyn_b = fp_out[:, K * C:].reshape(B, K)
    seg = jnp.einsum("bkc,bcw->bkw", r16(dyn_w), x16) + dyn_b[:, :, None]
    return [g.reshape(B, K, H, W), seg.reshape(B, K, H, W)]


# ----------------------------------- main --------------------------------------

if __name__ == "__main__":
    B, Cin, H, W = 2, 8, 16, 16          # SegmentationCondHead(in_channels=8, out_channels=3)
    num_classes = 3

    key = jax.random.PRNGKey(0)
    k_in, k_par = jax.random.split(key)
    feat = jax.random.normal(k_in, (B, Cin, H, W), jnp.float32)
    params = make_params(Cin, num_classes, k_par)

    fwd = jax.jit(segmentation_cond_head)
    coarse_pre, pre = fwd(feat, params)
    jax.block_until_ready(coarse_pre)
    jax.block_until_ready(pre)

    ref_coarse, ref_pre = reference(feat, params)
    # Tolerance accounts for the approximate EUP reciprocal in the in-kernel softmax
    # (everything else — bf16 operand rounding, f32 accumulation — is mirrored).
    assert jnp.allclose(coarse_pre, ref_coarse, atol=5e-3, rtol=5e-3)
    assert jnp.allclose(pre, ref_pre, atol=5e-3, rtol=5e-3)

    print("KERNEL_OK")
</pallas_src>

<mosaic_0001>
module attributes {stable_mosaic.version = 11 : i64} {
  func.func @_stage1_kernel(%arg0: i32, %arg1: i32, %arg2: memref<1x8x256xbf16, #tpu.memory_space<vmem>>, %arg3: memref<4x8xbf16, #tpu.memory_space<vmem>>, %arg4: memref<4x1xf32, #tpu.memory_space<vmem>>, %arg5: memref<3x4xbf16, #tpu.memory_space<vmem>>, %arg6: memref<3x1xf32, #tpu.memory_space<vmem>>, %arg7: memref<1x3x256xf32, #tpu.memory_space<vmem>>, %arg8: memref<1x4x3xf32, #tpu.memory_space<vmem>>) attributes {dimension_semantics = [#tpu.dimension_semantics<parallel>, #tpu.dimension_semantics<arbitrary>], iteration_bounds = array<i64: 2, 1>, scalar_prefetch = 0 : i64, scratch_operands = 0 : i64, tpu.core_type = #tpu.core_type<tc>, window_params = [{transform_indices = @transform_0, window_bounds = array<i64: 1, 8, 256>}, {pipeline_mode = #tpu.pipeline_mode<synchronous>, transform_indices = @transform_1, window_bounds = array<i64: 4, 8>}, {pipeline_mode = #tpu.pipeline_mode<synchronous>, transform_indices = @transform_2, window_bounds = array<i64: 4, 1>}, {pipeline_mode = #tpu.pipeline_mode<synchronous>, transform_indices = @transform_3, window_bounds = array<i64: 3, 4>}, {pipeline_mode = #tpu.pipeline_mode<synchronous>, transform_indices = @transform_4, window_bounds = array<i64: 3, 1>}, {transform_indices = @transform_5, window_bounds = array<i64: 1, 3, 256>}, {transform_indices = @transform_6, window_bounds = array<i64: 1, 4, 3>}]} {
    %c0 = arith.constant 0 : index
    %c0_0 = arith.constant 0 : index
    %0 = vector.load %arg3[%c0, %c0_0] : memref<4x8xbf16, #tpu.memory_space<vmem>>, vector<4x8xbf16>
    %c0_1 = arith.constant 0 : index
    %c0_2 = arith.constant 0 : index
    %c0_3 = arith.constant 0 : index
    %1 = vector.load %arg2[%c0_1, %c0_2, %c0_3] : memref<1x8x256xbf16, #tpu.memory_space<vmem>>, vector<1x8x256xbf16>
    %2 = vector.shape_cast %1 : vector<1x8x256xbf16> to vector<8x256xbf16>
    %cst = arith.constant dense<0.000000e+00> : vector<4x256xf32>
    %3 = tpu.matmul %0, %2, %cst {dimension_numbers = #tpu.dot_dimension_numbers<[1], [0], [0], [1], [0, 0, 1, 1], [], []>} : vector<4x8xbf16>, vector<8x256xbf16>, vector<4x256xf32> -> vector<4x256xf32>
    %c0_4 = arith.constant 0 : index
    %c0_5 = arith.constant 0 : index
    %4 = vector.load %arg4[%c0_4, %c0_5] : memref<4x1xf32, #tpu.memory_space<vmem>>, vector<4x1xf32>
    %5 = vector.broadcast %4 : vector<4x1xf32> to vector<4x256xf32>
    %6 = arith.addf %3, %5 : vector<4x256xf32>
    %cst_6 = arith.constant 0.000000e+00 : f32
    %7 = vector.broadcast %cst_6 : f32 to vector<4x256xf32>
    %8 = arith.maximumf %6, %7 : vector<4x256xf32>
    %9 = arith.truncf %8 : vector<4x256xf32> to vector<4x256xbf16>
    %c0_7 = arith.constant 0 : index
    %c0_8 = arith.constant 0 : index
    %10 = vector.load %arg5[%c0_7, %c0_8] : memref<3x4xbf16, #tpu.memory_space<vmem>>, vector<3x4xbf16>
    %cst_9 = arith.constant dense<0.000000e+00> : vector<3x256xf32>
    %11 = tpu.matmul %10, %9, %cst_9 {dimension_numbers = #tpu.dot_dimension_numbers<[1], [0], [0], [1], [0, 0, 1, 1], [], []>} : vector<3x4xbf16>, vector<4x256xbf16>, vector<3x256xf32> -> vector<3x256xf32>
    %c0_10 = arith.constant 0 : index
    %c0_11 = arith.constant 0 : index
    %12 = vector.load %arg6[%c0_10, %c0_11] : memref<3x1xf32, #tpu.memory_space<vmem>>, vector<3x1xf32>
    %13 = vector.broadcast %12 : vector<3x1xf32> to vector<3x256xf32>
    %14 = arith.addf %11, %13 : vector<3x256xf32>
    %c0_12 = arith.constant 0 : index
    %c0_13 = arith.constant 0 : index
    %c0_14 = arith.constant 0 : index
    %15 = vector.load %arg7[%c0_12, %c0_13, %c0_14] : memref<1x3x256xf32, #tpu.memory_space<vmem>>, vector<1x3x256xf32>
    %16 = vector.shape_cast %15 : vector<1x3x256xf32> to vector<3x256xf32>
    %17 = vector.shape_cast %14 : vector<3x256xf32> to vector<1x3x256xf32>
    tpu.vector_store %arg7[%c0_12, %c0_13, %c0_14], %17 {strides = array<i32>} : memref<1x3x256xf32, #tpu.memory_space<vmem>>, vector<1x3x256xf32>,
    %cst_15 = arith.constant dense<0xFF800000> : vector<256xf32>
    %18 = vector.multi_reduction <maximumf>, %14, %cst_15 [0] : vector<3x256xf32> to vector<256xf32>
    %19 = vector.shape_cast %18 : vector<256xf32> to vector<1x256xf32>
    %20 = vector.broadcast %19 : vector<1x256xf32> to vector<3x256xf32>
    %21 = arith.subf %14, %20 : vector<3x256xf32>
    %22 = math.exp %21 : vector<3x256xf32>
    %cst_16 = arith.constant dense<0.000000e+00> : vector<256xf32>
    %23 = vector.multi_reduction <add>, %22, %cst_16 [0] : vector<3x256xf32> to vector<256xf32>
    %24 = vector.shape_cast %23 : vector<256xf32> to vector<1x256xf32>
    %25 = tpu.reciprocal %24 {approx = true} : vector<1x256xf32> -> vector<1x256xf32>
    %26 = vector.broadcast %25 : vector<1x256xf32> to vector<3x256xf32>
    %27 = arith.mulf %22, %26 : vector<3x256xf32>
    %28 = arith.truncf %27 : vector<3x256xf32> to vector<3x256xbf16>
    %cst_17 = arith.constant dense<0.000000e+00> : vector<4x3xf32>
    %29 = tpu.matmul %9, %28, %cst_17 {dimension_numbers = #tpu.dot_dimension_numbers<[1], [1], [0], [0], [0, 0, 1, 0], [], []>} : vector<4x256xbf16>, vector<3x256xbf16>, vector<4x3xf32> -> vector<4x3xf32>
    %c0_i32 = arith.constant 0 : i32
    %30 = arith.cmpi eq, %arg1, %c0_i32 : i32
    %31 = arith.extui %30 : i1 to i32
    %c0_i32_18 = arith.constant 0 : i32
    %32 = arith.cmpi ne, %31, %c0_i32_18 : i32
    scf.if %32 {
      %cst_25 = arith.constant 0.000000e+00 : f32
      %39 = vector.broadcast %cst_25 : f32 to vector<1x4x3xf32>
      %c0_26 = arith.constant 0 : index
      %c0_27 = arith.constant 0 : index
      %c0_28 = arith.constant 0 : index
      %40 = vector.load %arg8[%c0_26, %c0_27, %c0_28] : memref<1x4x3xf32, #tpu.memory_space<vmem>>, vector<1x4x3xf32>
      tpu.vector_store %arg8[%c0_26, %c0_27, %c0_28], %39 {strides = array<i32>} : memref<1x4x3xf32, #tpu.memory_space<vmem>>, vector<1x4x3xf32>,
    } else {
    }
    %c0_19 = arith.constant 0 : index
    %c0_20 = arith.constant 0 : index
    %c0_21 = arith.constant 0 : index
    %33 = vector.load %arg8[%c0_19, %c0_20, %c0_21] : memref<1x4x3xf32, #tpu.memory_space<vmem>>, vector<1x4x3xf32>
    %34 = vector.shape_cast %33 : vector<1x4x3xf32> to vector<4x3xf32>
    %35 = arith.addf %34, %29 : vector<4x3xf32>
    %c0_22 = arith.constant 0 : index
    %c0_23 = arith.constant 0 : index
    %c0_24 = arith.constant 0 : index
    %36 = vector.load %arg8[%c0_22, %c0_23, %c0_24] : memref<1x4x3xf32, #tpu.memory_space<vmem>>, vector<1x4x3xf32>
    %37 = vector.shape_cast %36 : vector<1x4x3xf32> to vector<4x3xf32>
    %38 = vector.shape_cast %35 : vector<4x3xf32> to vector<1x4x3xf32>
    tpu.vector_store %arg8[%c0_22, %c0_23, %c0_24], %38 {strides = array<i32>} : memref<1x4x3xf32, #tpu.memory_space<vmem>>, vector<1x4x3xf32>,
    return
  }
  func.func @transform_0(%arg0: i32, %arg1: i32) -> (i32, i32, i32) {
    %c0_i32 = arith.constant 0 : i32
    %c0_i32_0 = arith.constant 0 : i32
    return %arg0, %c0_i32, %arg1 : i32, i32, i32
  }
  func.func @transform_1(%arg0: i32, %arg1: i32) -> (i32, i32) {
    %c0_i32 = arith.constant 0 : i32
    %c0_i32_0 = arith.constant 0 : i32
    %c0_i32_1 = arith.constant 0 : i32
    return %c0_i32, %c0_i32_0 : i32, i32
  }
  func.func @transform_2(%arg0: i32, %arg1: i32) -> (i32, i32) {
    %c0_i32 = arith.constant 0 : i32
    %c0_i32_0 = arith.constant 0 : i32
    %c0_i32_1 = arith.constant 0 : i32
    return %c0_i32, %c0_i32_0 : i32, i32
  }
  func.func @transform_3(%arg0: i32, %arg1: i32) -> (i32, i32) {
    %c0_i32 = arith.constant 0 : i32
    %c0_i32_0 = arith.constant 0 : i32
    %c0_i32_1 = arith.constant 0 : i32
    return %c0_i32, %c0_i32_0 : i32, i32
  }
  func.func @transform_4(%arg0: i32, %arg1: i32) -> (i32, i32) {
    %c0_i32 = arith.constant 0 : i32
    %c0_i32_0 = arith.constant 0 : i32
    %c0_i32_1 = arith.constant 0 : i32
    return %c0_i32, %c0_i32_0 : i32, i32
  }
  func.func @transform_5(%arg0: i32, %arg1: i32) -> (i32, i32, i32) {
    %c0_i32 = arith.constant 0 : i32
    %c0_i32_0 = arith.constant 0 : i32
    return %arg0, %c0_i32, %arg1 : i32, i32, i32
  }
  func.func @transform_6(%arg0: i32, %arg1: i32) -> (i32, i32, i32) {
    %c0_i32 = arith.constant 0 : i32
    %c0_i32_0 = arith.constant 0 : i32
    %c0_i32_1 = arith.constant 0 : i32
    return %arg0, %c0_i32, %c0_i32_0 : i32, i32, i32
  }
}

module attributes {stable_mosaic.version = 11 : i64} {
  func.func @_stage2_kernel(%arg0: i32, %arg1: i32, %arg2: memref<1x8x256xbf16, #tpu.memory_space<vmem>>, %arg3: memref<4x8xbf16, #tpu.memory_space<vmem>>, %arg4: memref<4x1xf32, #tpu.memory_space<vmem>>, %arg5: memref<1x3x4xbf16, #tpu.memory_space<vmem>>, %arg6: memref<1x3x1xf32, #tpu.memory_space<vmem>>, %arg7: memref<1x3x256xf32, #tpu.memory_space<vmem>>) attributes {dimension_semantics = [#tpu.dimension_semantics<parallel>, #tpu.dimension_semantics<parallel>], iteration_bounds = array<i64: 2, 1>, scalar_prefetch = 0 : i64, scratch_operands = 0 : i64, tpu.core_type = #tpu.core_type<tc>, window_params = [{transform_indices = @transform_0, window_bounds = array<i64: 1, 8, 256>}, {pipeline_mode = #tpu.pipeline_mode<synchronous>, transform_indices = @transform_1, window_bounds = array<i64: 4, 8>}, {pipeline_mode = #tpu.pipeline_mode<synchronous>, transform_indices = @transform_2, window_bounds = array<i64: 4, 1>}, {transform_indices = @transform_3, window_bounds = array<i64: 1, 3, 4>}, {transform_indices = @transform_4, window_bounds = array<i64: 1, 3, 1>}, {transform_indices = @transform_5, window_bounds = array<i64: 1, 3, 256>}]} {
    %c0 = arith.constant 0 : index
    %c0_0 = arith.constant 0 : index
    %0 = vector.load %arg3[%c0, %c0_0] : memref<4x8xbf16, #tpu.memory_space<vmem>>, vector<4x8xbf16>
    %c0_1 = arith.constant 0 : index
    %c0_2 = arith.constant 0 : index
    %c0_3 = arith.constant 0 : index
    %1 = vector.load %arg2[%c0_1, %c0_2, %c0_3] : memref<1x8x256xbf16, #tpu.memory_space<vmem>>, vector<1x8x256xbf16>
    %2 = vector.shape_cast %1 : vector<1x8x256xbf16> to vector<8x256xbf16>
    %cst = arith.constant dense<0.000000e+00> : vector<4x256xf32>
    %3 = tpu.matmul %0, %2, %cst {dimension_numbers = #tpu.dot_dimension_numbers<[1], [0], [0], [1], [0, 0, 1, 1], [], []>} : vector<4x8xbf16>, vector<8x256xbf16>, vector<4x256xf32> -> vector<4x256xf32>
    %c0_4 = arith.constant 0 : index
    %c0_5 = arith.constant 0 : index
    %4 = vector.load %arg4[%c0_4, %c0_5] : memref<4x1xf32, #tpu.memory_space<vmem>>, vector<4x1xf32>
    %5 = vector.broadcast %4 : vector<4x1xf32> to vector<4x256xf32>
    %6 = arith.addf %3, %5 : vector<4x256xf32>
    %cst_6 = arith.constant 0.000000e+00 : f32
    %7 = vector.broadcast %cst_6 : f32 to vector<4x256xf32>
    %8 = arith.maximumf %6, %7 : vector<4x256xf32>
    %9 = arith.truncf %8 : vector<4x256xf32> to vector<4x256xbf16>
    %c0_7 = arith.constant 0 : index
    %c0_8 = arith.constant 0 : index
    %c0_9 = arith.constant 0 : index
    %10 = vector.load %arg5[%c0_7, %c0_8, %c0_9] : memref<1x3x4xbf16, #tpu.memory_space<vmem>>, vector<1x3x4xbf16>
    %11 = vector.shape_cast %10 : vector<1x3x4xbf16> to vector<3x4xbf16>
    %cst_10 = arith.constant dense<0.000000e+00> : vector<3x256xf32>
    %12 = tpu.matmul %11, %9, %cst_10 {dimension_numbers = #tpu.dot_dimension_numbers<[1], [0], [0], [1], [0, 0, 1, 1], [], []>} : vector<3x4xbf16>, vector<4x256xbf16>, vector<3x256xf32> -> vector<3x256xf32>
    %c0_11 = arith.constant 0 : index
    %c0_12 = arith.constant 0 : index
    %c0_13 = arith.constant 0 : index
    %13 = vector.load %arg6[%c0_11, %c0_12, %c0_13] : memref<1x3x1xf32, #tpu.memory_space<vmem>>, vector<1x3x1xf32>
    %14 = vector.shape_cast %13 : vector<1x3x1xf32> to vector<3x1xf32>
    %15 = vector.broadcast %14 : vector<3x1xf32> to vector<3x256xf32>
    %16 = arith.addf %12, %15 : vector<3x256xf32>
    %c0_14 = arith.constant 0 : index
    %c0_15 = arith.constant 0 : index
    %c0_16 = arith.constant 0 : index
    %17 = vector.load %arg7[%c0_14, %c0_15, %c0_16] : memref<1x3x256xf32, #tpu.memory_space<vmem>>, vector<1x3x256xf32>
    %18 = vector.shape_cast %17 : vector<1x3x256xf32> to vector<3x256xf32>
    %19 = vector.shape_cast %16 : vector<3x256xf32> to vector<1x3x256xf32>
    tpu.vector_store %arg7[%c0_14, %c0_15, %c0_16], %19 {strides = array<i32>} : memref<1x3x256xf32, #tpu.memory_space<vmem>>, vector<1x3x256xf32>,
    return
  }
  func.func @transform_0(%arg0: i32, %arg1: i32) -> (i32, i32, i32) {
    %c0_i32 = arith.constant 0 : i32
    %c0_i32_0 = arith.constant 0 : i32
    return %arg0, %c0_i32, %arg1 : i32, i32, i32
  }
  func.func @transform_1(%arg0: i32, %arg1: i32) -> (i32, i32) {
    %c0_i32 = arith.constant 0 : i32
    %c0_i32_0 = arith.constant 0 : i32
    %c0_i32_1 = arith.constant 0 : i32
    return %c0_i32, %c0_i32_0 : i32, i32
  }
  func.func @transform_2(%arg0: i32, %arg1: i32) -> (i32, i32) {
    %c0_i32 = arith.constant 0 : i32
    %c0_i32_0 = arith.constant 0 : i32
    %c0_i32_1 = arith.constant 0 : i32
    return %c0_i32, %c0_i32_0 : i32, i32
  }
  func.func @transform_3(%arg0: i32, %arg1: i32) -> (i32, i32, i32) {
    %c0_i32 = arith.constant 0 : i32
    %c0_i32_0 = arith.constant 0 : i32
    %c0_i32_1 = arith.constant 0 : i32
    return %arg0, %c0_i32, %c0_i32_0 : i32, i32, i32
  }
  func.func @transform_4(%arg0: i32, %arg1: i32) -> (i32, i32, i32) {
    %c0_i32 = arith.constant 0 : i32
    %c0_i32_0 = arith.constant 0 : i32
    %c0_i32_1 = arith.constant 0 : i32
    return %arg0, %c0_i32, %c0_i32_0 : i32, i32, i32
  }
  func.func @transform_5(%arg0: i32, %arg1: i32) -> (i32, i32, i32) {
    %c0_i32 = arith.constant 0 : i32
    %c0_i32_0 = arith.constant 0 : i32
    return %arg0, %c0_i32, %arg1 : i32, i32, i32
  }
}

</mosaic_0001>

<llo_original>
// kernel: segmentation_cond_head.3
$region0: #{segmentation_cond_head.3}
  #allocation0 [shape = 'u32[]', space=smem, size = 0x4, offset = 0x4, fixed_abs, tag = 'smem constant byte address 0x4 - core index']
  #allocation1 [shape = 'u32[72,128]{1,0:T(1,128)}', space=vmem, size = 0x9000, scoped, tag = 'internal scratch']
  %s0 = inlined_call_operand.vmem [shape: bf16[2,8,256], index: 0, kind: input, shape index: {}]
  %s1 = inlined_call_operand.vmem [shape: bf16[4,8], index: 1, kind: input, shape index: {}]
  %s2 = inlined_call_operand.vmem [shape: f32[4,1], index: 2, kind: input, shape index: {}]
  %s3 = inlined_call_operand.vmem [shape: bf16[2,3,4], index: 3, kind: input, shape index: {}]
  %s4 = inlined_call_operand.vmem [shape: f32[2,3,1], index: 4, kind: input, shape index: {}]
  %s5 = inlined_call_operand.vmem [shape: f32[2,3,256], index: 5, kind: output, shape index: {}]
  %s6 = sld [smem:[#allocation0]]
  $region53: #{segmentation_cond_head.3} parent=0
    _
  %s8 = ssub.s32 1, %s6
  %s9 = scalar_select 0, %s8, %s6
  loop: start=0, step=1, limit=4
  $region2: #{segmentation_cond_head.3} parent=0 // loop_pre_header
    _
  $region3: #{segmentation_cond_head.3} parent=0 // loop_header
    %s11 = sphi 0, %s15
    %p12 = scmp.ge.s32.totalorder %s11, 4
    %s18 = sphi 0, %s30
    %s19 = sphi 0, %s26
    %s20 = sphi 0, %s18
    %s21 = sphi 0, %s19
    %s22 = sphi 0, %s20
    %s23 = sphi 0, %s21
    %s35 = sphi 0, %s37
    %s38 = sphi 0, %s35
    %s39 = sphi 0, %s38
    %s55 = sphi 0, %s39
    %s59 = sphi 0, %s59
    %s61 = sphi 0, %s59
    %s62 = sphi 0, %s61
    %s76 = sphi 0, %s62
    %s80 = sphi 0, %s80
    %s82 = sphi 0, %s80
    %s83 = sphi 0, %s82
    %s97 = sphi 0, %s83
    %s103 = sphi 0, %s105
    %s106 = sphi 0, %s103
    %s107 = sphi 0, %s106
    %s123 = sphi 0, %s107
    %s129 = sphi 0, %s131
    %s132 = sphi 0, %s129
    %s133 = sphi 0, %s132
    %s149 = sphi 0, %s133
    %s157 = sphi 0, %s159
    %s160 = sphi 0, %s157
    %s161 = sphi 0, %s160
    %s177 = sphi 0, %s161
  $region4: #{segmentation_cond_head.3} parent=0 // loop_header_branch
    %14 = sbr.rel (%p12) target = $region8
  $region5: #{segmentation_cond_head.3} parent=0 // loop_body
    %s16 = ssub.s32 %s11, 1
    %s17 = ssub.s32 %s11, 2
    %s24 = sadd.s32 1, %s19
    %p25 = scmp.ge.s32.totalorder %s24, 1
    %s26 = scalar_select %p25, 0, %s24
    %s27 = sadd.s32 1, %s18
    %s28 = scalar_select %p25, %s27, %s18
    %p29 = scmp.ge.s32.totalorder %s28, 2
    %s30 = scalar_select %p29, 0, %s28
    %s31 = ssub.s32 %s18, %s30
    %s32 = ssub.s32 %s19, %s26
    %s33 = sor.u32 %s31, %s32
    %p34 = scmp.eq.s32.totalorder %s33, 0
    %s36 = sadd.s32 %s35, 1
    %s37 = scalar_select %p34, %s35, %s36
    %p40 = pneg %p34
    %p41 = scmp.eq.s32.totalorder %s11, 1
    %p42 = por %p40, %p41
    %p43 = scmp.ne.s32.totalorder %s35, %s38
    %p44 = scmp.eq.s32.totalorder %s11, 0
    %p45 = por %p43, %p44
    %p46 = scmp.ne.s32.totalorder %s35, %s38
    %p47 = scmp.eq.s32.totalorder %s16, 1
    %p48 = por %p46, %p47
    %p49 = scmp.ne.s32.totalorder %s38, %s39
    %p50 = scmp.eq.s32.totalorder %s16, 0
    %p51 = por %p49, %p50
    %p52 = scmp.ne.s32.totalorder %s38, %s39
    %p53 = scmp.eq.s32.totalorder %s17, 1
    %p54 = por %p52, %p53
    %p56 = scmp.ne.s32.totalorder %s39, %s55
    %p57 = scmp.eq.s32.totalorder %s17, 0
    %p58 = por %p56, %p57
    %s60 = sadd.s32 %s59, 1
    %p63 = scmp.eq.s32.totalorder %s11, 1
    %p64 = scmp.ne.s32.totalorder %s59, %s61
    %p65 = scmp.eq.s32.totalorder %s11, 0
    %p66 = por %p64, %p65
    %p67 = scmp.ne.s32.totalorder %s59, %s61
    %p68 = scmp.eq.s32.totalorder %s16, 1
    %p69 = por %p67, %p68
    %p70 = scmp.ne.s32.totalorder %s61, %s62
    %p71 = scmp.eq.s32.totalorder %s16, 0
    %p72 = por %p70, %p71
    %p73 = scmp.ne.s32.totalorder %s61, %s62
    %p74 = scmp.eq.s32.totalorder %s17, 1
    %p75 = por %p73, %p74
    %p77 = scmp.ne.s32.totalorder %s62, %s76
    %p78 = scmp.eq.s32.totalorder %s17, 0
    %p79 = por %p77, %p78
    %s81 = sadd.s32 %s80, 1
    %p84 = scmp.eq.s32.totalorder %s11, 1
    %p85 = scmp.ne.s32.totalorder %s80, %s82
    %p86 = scmp.eq.s32.totalorder %s11, 0
    %p87 = por %p85, %p86
    %p88 = scmp.ne.s32.totalorder %s80, %s82
    %p89 = scmp.eq.s32.totalorder %s16, 1
    %p90 = por %p88, %p89
    %p91 = scmp.ne.s32.totalorder %s82, %s83
    %p92 = scmp.eq.s32.totalorder %s16, 0
    %p93 = por %p91, %p92
    %p94 = scmp.ne.s32.totalorder %s82, %s83
    %p95 = scmp.eq.s32.totalorder %s17, 1
    %p96 = por %p94, %p95
    %p98 = scmp.ne.s32.totalorder %s83, %s97
    %p99 = scmp.eq.s32.totalorder %s17, 0
    %p100 = por %p98, %p99
    %s101 = ssub.s32 %s18, %s30
    %p102 = scmp.eq.s32.totalorder %s101, 0
    %s104 = sadd.s32 %s103, 1
    %s105 = scalar_select %p102, %s103, %s104
    %p108 = pneg %p102
    %p109 = scmp.eq.s32.totalorder %s11, 1
    %p110 = por %p108, %p109
    %p111 = scmp.ne.s32.totalorder %s103, %s106
    %p112 = scmp.eq.s32.totalorder %s11, 0
    %p113 = por %p111, %p112
    %p114 = scmp.ne.s32.totalorder %s103, %s106
    %p115 = scmp.eq.s32.totalorder %s16, 1
    %p116 = por %p114, %p115
    %p117 = scmp.ne.s32.totalorder %s106, %s107
    %p118 = scmp.eq.s32.totalorder %s16, 0
    %p119 = por %p117, %p118
    %p120 = scmp.ne.s32.totalorder %s106, %s107
    %p121 = scmp.eq.s32.totalorder %s17, 1
    %p122 = por %p120, %p121
    %p124 = scmp.ne.s32.totalorder %s107, %s123
    %p125 = scmp.eq.s32.totalorder %s17, 0
    %p126 = por %p124, %p125
    %s127 = ssub.s32 %s18, %s30
    %p128 = scmp.eq.s32.totalorder %s127, 0
    %s130 = sadd.s32 %s129, 1
    %s131 = scalar_select %p128, %s129, %s130
    %p134 = pneg %p128
    %p135 = scmp.eq.s32.totalorder %s11, 1
    %p136 = por %p134, %p135
    %p137 = scmp.ne.s32.totalorder %s129, %s132
    %p138 = scmp.eq.s32.totalorder %s11, 0
    %p139 = por %p137, %p138
    %p140 = scmp.ne.s32.totalorder %s129, %s132
    %p141 = scmp.eq.s32.totalorder %s16, 1
    %p142 = por %p140, %p141
    %p143 = scmp.ne.s32.totalorder %s132, %s133
    %p144 = scmp.eq.s32.totalorder %s16, 0
    %p145 = por %p143, %p144
    %p146 = scmp.ne.s32.totalorder %s132, %s133
    %p147 = scmp.eq.s32.totalorder %s17, 1
    %p148 = por %p146, %p147
    %p150 = scmp.ne.s32.totalorder %s133, %s149
    %p151 = scmp.eq.s32.totalorder %s17, 0
    %p152 = por %p150, %p151
    %s153 = ssub.s32 %s18, %s30
    %s154 = ssub.s32 %s19, %s26
    %s155 = sor.u32 %s153, %s154
    %p156 = scmp.eq.s32.totalorder %s155, 0
    %s158 = sadd.s32 %s157, 1
    %s159 = scalar_select %p156, %s157, %s158
    %p162 = pneg %p156
    %p163 = scmp.eq.s32.totalorder %s11, 1
    %p164 = por %p162, %p163
    %p165 = scmp.ne.s32.totalorder %s157, %s160
    %p166 = scmp.eq.s32.totalorder %s11, 0
    %p167 = por %p165, %p166
    %p168 = scmp.ne.s32.totalorder %s157, %s160
    %p169 = scmp.eq.s32.totalorder %s16, 1
    %p170 = por %p168, %p169
    %p171 = scmp.ne.s32.totalorder %s160, %s161
    %p172 = scmp.eq.s32.totalorder %s16, 0
    %p173 = por %p171, %p172
    %p174 = scmp.ne.s32.totalorder %s160, %s161
    %p175 = scmp.eq.s32.totalorder %s17, 1
    %p176 = por %p174, %p175
    %p178 = scmp.ne.s32.totalorder %s161, %s177
    %p179 = scmp.eq.s32.totalorder %s17, 0
    %p180 = por %p178, %p179
    %p181 = scmp.le.s32.totalorder 1, %s11
    %p182 = scmp.lt.s32.totalorder %s11, 3
    %p183 = pnand %p181, %p182
    %p184 = pneg %p183
    // Predicated region
    $region9: #{segmentation_cond_head.3} parent=5 // pred_check
      _
    $region10: #{segmentation_cond_head.3} parent=5 // pred_check_branch
      %186 = sbr.rel (%p183) target = $region12
    $region11: #{segmentation_cond_head.3} parent=5 // pred_region
      %s187 = ssub.s32 %s11, 1
      // Predicated region
      $region13: #{segmentation_cond_head.3} parent=11 // pred_check
        %p188 = pneg %p72
      $region14: #{segmentation_cond_head.3} parent=11 // pred_check_branch
        %190 = sbr.rel (%p188) target = $region16
      $region15: #{segmentation_cond_head.3} parent=11 // pred_region
        _
      $region16: #{segmentation_cond_head.3} parent=11 // pred_fallthru
        _
      // Predicated region
      $region17: #{segmentation_cond_head.3} parent=11 // pred_check
        %p191 = pneg %p93
      $region18: #{segmentation_cond_head.3} parent=11 // pred_check_branch
        %193 = sbr.rel (%p191) target = $region20
      $region19: #{segmentation_cond_head.3} parent=11 // pred_region
        _
      $region20: #{segmentation_cond_head.3} parent=11 // pred_fallthru
        _
    $region12: #{segmentation_cond_head.3} parent=5 // pred_fallthru
      _
    %p194 = scmp.lt.s32.totalorder %s11, 2
    // Predicated region
    $region21: #{segmentation_cond_head.3} parent=5 // pred_check
      %p195 = pneg %p194
    $region22: #{segmentation_cond_head.3} parent=5 // pred_check_branch
      %197 = sbr.rel (%p195) target = $region24
    $region23: #{segmentation_cond_head.3} parent=5 // pred_region
      // Predicated region
      $region25: #{segmentation_cond_head.3} parent=23 // pred_check
        %p198 = pneg %p45
      $region26: #{segmentation_cond_head.3} parent=23 // pred_check_branch
        %200 = sbr.rel (%p198) target = $region28
      $region27: #{segmentation_cond_head.3} parent=23 // pred_region
        %s201 = smul.u32 2, %s19
        %p202 = scmp.lt.s32.totalorder %s18, 1
        %s203 = scalar_select %p202, %s18, 1
        %p204 = scmp.lt.s32.totalorder %s201, 1
        %s205 = scalar_select %p204, %s201, 1
        %s206 = smul.addr %s203, 2
        %s207 = sadd.s32 %s205, %s206
        %s208 = smul.addr %s207, 4
        %s209 = scalar_lea.vmem %s0, %s208
        %s210 = smul.u32 2, %s19
      $region28: #{segmentation_cond_head.3} parent=23 // pred_fallthru
        _
      // Predicated region
      $region29: #{segmentation_cond_head.3} parent=23 // pred_check
        %p211 = pneg %p113
      $region30: #{segmentation_cond_head.3} parent=23 // pred_check_branch
        %213 = sbr.rel (%p211) target = $region32
      $region31: #{segmentation_cond_head.3} parent=23 // pred_region
        %p214 = scmp.lt.s32.totalorder %s18, 1
        %s215 = scalar_select %p214, %s18, 1
        %s216 = smul.addr %s215, 2
        %s217 = scalar_lea.vmem %s3, %s216
      $region32: #{segmentation_cond_head.3} parent=23 // pred_fallthru
        _
      // Predicated region
      $region33: #{segmentation_cond_head.3} parent=23 // pred_check
        %p218 = pneg %p139
      $region34: #{segmentation_cond_head.3} parent=23 // pred_check_branch
        %220 = sbr.rel (%p218) target = $region36
      $region35: #{segmentation_cond_head.3} parent=23 // pred_region
        %p221 = scmp.lt.s32.totalorder %s18, 1
        %s222 = scalar_select %p221, %s18, 1
        %s223 = smul.addr %s222, 4
        %s224 = scalar_lea.vmem %s4, %s223
      $region36: #{segmentation_cond_head.3} parent=23 // pred_fallthru
        _
    $region24: #{segmentation_cond_head.3} parent=5 // pred_fallthru
      _
    %p225 = scmp.le.s32.totalorder 1, %s11
    %p226 = scmp.lt.s32.totalorder %s11, 3
    %p227 = pnand %p225, %p226
    %p228 = pneg %p227
    // Predicated region
    $region37: #{segmentation_cond_head.3} parent=5 // pred_check
      _
    $region38: #{segmentation_cond_head.3} parent=5 // pred_check_branch
      %230 = sbr.rel (%p227) target = $region40
    $region39: #{segmentation_cond_head.3} parent=5 // pred_region
      %s231 = ssub.s32 %s11, 1
      %s232 = smul.u32 2, %s21
      %p233 = scmp.lt.s32.totalorder %s20, 1
      %s234 = scalar_select %p233, %s20, 1
      %p235 = scmp.lt.s32.totalorder %s232, 1
      %s236 = scalar_select %p235, %s232, 1
      %s237 = smul.addr %s234, 2
      %s238 = sadd.s32 %s236, %s237
      %s239 = smul.addr %s238, 4
      %s240 = scalar_lea.vmem %s0, %s239
      %p241 = pneg %p51
      %p242 = pneg %p48
      %p243 = pneg %p72
      %p244 = pneg %p69
      %p245 = pneg %p93
      %p246 = pneg %p90
      %p247 = scmp.lt.s32.totalorder %s20, 1
      %s248 = scalar_select %p247, %s20, 1
      %s249 = smul.addr %s248, 2
      %s250 = scalar_lea.vmem %s3, %s249
      %p251 = pneg %p119
      %p252 = pneg %p116
      %p253 = scmp.lt.s32.totalorder %s20, 1
      %s254 = scalar_select %p253, %s20, 1
      %s255 = smul.addr %s254, 4
      %s256 = scalar_lea.vmem %s4, %s255
      %p257 = pneg %p145
      %p258 = pneg %p142
      %p259 = pneg %p173
      %p260 = pneg %p170
      %s261 = smul.u32 2, %s21
      %p262 = scmp.lt.s32.totalorder %s20, 1
      %s263 = scalar_select %p262, %s20, 1
      %p264 = scmp.lt.s32.totalorder %s261, 1
      %s265 = scalar_select %p264, %s261, 1
      %s266 = smul.addr %s263, 2
      %s267 = sadd.s32 %s265, %s266
      %s268 = smul.addr %s267, 4
      %s269 = scalar_lea.vmem %s5, %s268
      %s270 = smul.u32 2, %s21
      %p271 = scmp.lt.s32.totalorder %s20, 1
      %s272 = scalar_select %p271, %s20, 1
      %p273 = scmp.lt.s32.totalorder %s270, 1
      %s274 = scalar_select %p273, %s270, 1
      %s275 = smul.addr %s272, 2
      %s276 = sadd.s32 %s274, %s275
      %s277 = smul.addr %s276, 4
      %s278 = scalar_lea.vmem %s0, %s277
      %s279 = smul.u32 2, %s21
      %p280 = scmp.lt.s32.totalorder %s20, 1
      %s281 = scalar_select %p280, %s20, 1
      %s282 = smul.addr %s281, 2
      %s283 = scalar_lea.vmem %s3, %s282
      %p284 = scmp.lt.s32.totalorder %s20, 1
      %s285 = scalar_select %p284, %s20, 1
      %s286 = smul.addr %s285, 4
      %s287 = scalar_lea.vmem %s4, %s286
      %s288 = smul.u32 2, %s21
      %p289 = scmp.lt.s32.totalorder %s20, 1
      %s290 = scalar_select %p289, %s20, 1
      %p291 = scmp.lt.s32.totalorder %s288, 1
      %s292 = scalar_select %p291, %s288, 1
      %s293 = smul.addr %s290, 2
      %s294 = sadd.s32 %s292, %s293
      %s295 = smul.addr %s294, 4
      %s296 = scalar_lea.vmem %s5, %s295
      %s297 = smul.u32 2, %s21
      %v299 = vld [vmem:[%s1] sm:$0x3]
      %v300 = vld [vmem:[%s278] sm:$0xff]
      %v301 = vld [vmem:[%s2] sm:$0xf]
      %303 = vset.pattern.permute.xlu0 0
      %304 = vperm.xlu0 %303, %v301
      %v305 = vpop.permute.xlu0 %304
      %v308 = vunpack.c.l.b16 %v300
      %v309 = vunpack.c.h.b16 %v300
      %v310 = vpack.c.b16 %v308, %v308
      %v311 = vpack.c.b16 %v309, %v309
      %vm312 = vcmask 64512
      %v314 = vsel %vm312, %v299, 0
      %vm316 = vcmask 1043456
      %v318 = vsel %vm316, %v310, 0
      %v321 = vsel %vm316, %v311, 0
      %323 = vmatpush.bf16.msra.mxu0 0
      %324 = vmatpush.bf16.msra.mxu0 0
      %325 = vmatpush.bf16.msra.mxu0 0
      %326 = vmatpush.bf16.msra.mxu0 0
      %327 = vmatpush.bf16.msra.mxu0 0
      %328 = vmatpush.bf16.msra.mxu0 0
      %329 = vmatpush.bf16.msra.mxu0 0
      %330 = vmatpush.bf16.msra.mxu0 %v318
      %331 = vmatmul.bf16.gmra.mxu0 %v314
      %v332 = vpop.f32.mrf.mxu0
      %v333 = vadd.f32 %v305, %v332
      %v334 = vpop.f32.mrf.mxu0
      %335 = vdwg.mxu0
      %336 = vmatpush.bf16.msra.mxu0 0
      %337 = vmatpush.bf16.msra.mxu0 0
      %338 = vmatpush.bf16.msra.mxu0 0
      %339 = vmatpush.bf16.msra.mxu0 0
      %340 = vmatpush.bf16.msra.mxu0 0
      %341 = vmatpush.bf16.msra.mxu0 0
      %342 = vmatpush.bf16.msra.mxu0 0
      %343 = vmatpush.bf16.msra.mxu0 %v321
      %344 = vmatmul.bf16.gmra.mxu0 %v314
      %v345 = vpop.f32.mrf.mxu0
      %v346 = vadd.f32 %v305, %v345
      %v347 = vpop.f32.mrf.mxu0
      %348 = vdwg.mxu0
      %v349 = vmax.f32 %v333, 0.0
      %v350 = vmax.f32 %v346, 0.0
      %v351 = vpack.c.bf16 %v349, %v349
      %v352 = vpack.c.bf16 %v350, %v350
      %v353 = vld [vmem:[%s283] sm:$0x3]
      %v354 = vld [vmem:[%s287] sm:$0x7]
      %356 = vset.pattern.permute.xlu0 0
      %357 = vperm.xlu0 %356, %v354
      %v358 = vpop.permute.xlu0 %357
      %vm360 = vcmask 31744
      %v362 = vsel %vm360, %v353, 0
      %vm364 = vcmask 1041408
      %v366 = vsel %vm364, %v351, 0
      %v369 = vsel %vm364, %v352, 0
      %371 = vmatpush.bf16.msra.mxu0 0
      %372 = vmatpush.bf16.msra.mxu0 0
      %373 = vmatpush.bf16.msra.mxu0 0
      %374 = vmatpush.bf16.msra.mxu0 0
      %375 = vmatpush.bf16.msra.mxu0 0
      %376 = vmatpush.bf16.msra.mxu0 0
      %377 = vmatpush.bf16.msra.mxu0 0
      %378 = vmatpush.bf16.msra.mxu0 %v366
      %379 = vmatmul.bf16.gmra.mxu0 %v362
      %v380 = vpop.f32.mrf.mxu0
      %v381 = vadd.f32 %v358, %v380
      %v382 = vpop.f32.mrf.mxu0
      %383 = vdwg.mxu0
      %384 = vmatpush.bf16.msra.mxu0 0
      %385 = vmatpush.bf16.msra.mxu0 0
      %386 = vmatpush.bf16.msra.mxu0 0
      %387 = vmatpush.bf16.msra.mxu0 0
      %388 = vmatpush.bf16.msra.mxu0 0
      %389 = vmatpush.bf16.msra.mxu0 0
      %390 = vmatpush.bf16.msra.mxu0 0
      %391 = vmatpush.bf16.msra.mxu0 %v369
      %392 = vmatmul.bf16.gmra.mxu0 %v362
      %v393 = vpop.f32.mrf.mxu0
      %v394 = vadd.f32 %v358, %v393
      %v395 = vpop.f32.mrf.mxu0
      %396 = vdwg.mxu0
      %v399 = vrot.slane %v394, 4
      %v400 = vsel %vm316, %v381, %v399
      %402 = vst [vmem:[%s296] sm:$0x77] %v400
      %s403 = smul.u32 2, %s21
      %p404 = scmp.lt.s32.totalorder %s20, 1
      %s405 = scalar_select %p404, %s20, 1
      %p406 = scmp.lt.s32.totalorder %s403, 1
      %s407 = scalar_select %p406, %s403, 1
      %s408 = smul.addr %s405, 2
      %s409 = sadd.s32 %s407, %s408
      %s410 = smul.addr %s409, 4
      %s411 = scalar_lea.vmem %s5, %s410
      // Predicated region
      $region41: #{segmentation_cond_head.3} parent=39 // pred_check
        %p412 = pneg %p170
      $region42: #{segmentation_cond_head.3} parent=39 // pred_check_branch
        %414 = sbr.rel (%p412) target = $region44
      $region43: #{segmentation_cond_head.3} parent=39 // pred_region
        %s415 = smul.u32 2, %s21
      $region44: #{segmentation_cond_head.3} parent=39 // pred_fallthru
        _
    $region40: #{segmentation_cond_head.3} parent=5 // pred_fallthru
      _
    %p416 = scmp.le.s32.totalorder 2, %s11
    // Predicated region
    $region45: #{segmentation_cond_head.3} parent=5 // pred_check
      %p417 = pneg %p416
    $region46: #{segmentation_cond_head.3} parent=5 // pred_check_branch
      %419 = sbr.rel (%p417) target = $region48
    $region47: #{segmentation_cond_head.3} parent=5 // pred_region
      %s420 = ssub.s32 %s11, 2
      // Predicated region
      $region49: #{segmentation_cond_head.3} parent=47 // pred_check
        %p421 = pneg %p176
      $region50: #{segmentation_cond_head.3} parent=47 // pred_check_branch
        %423 = sbr.rel (%p421) target = $region52
      $region51: #{segmentation_cond_head.3} parent=47 // pred_region
        %s424 = smul.u32 2, %s23
        %p425 = scmp.lt.s32.totalorder %s22, 1
        %s426 = scalar_select %p425, %s22, 1
        %p427 = scmp.lt.s32.totalorder %s424, 1
        %s428 = scalar_select %p427, %s424, 1
        %s429 = smul.addr %s426, 2
        %s430 = sadd.s32 %s428, %s429
        %s431 = smul.addr %s430, 4
        %s432 = scalar_lea.vmem %s5, %s431
      $region52: #{segmentation_cond_head.3} parent=47 // pred_fallthru
        _
    $region48: #{segmentation_cond_head.3} parent=5 // pred_fallthru
      _
  $region6: #{segmentation_cond_head.3} parent=0 // loop_footer
    %s15 = sadd.s32 1, %s11
  $region7: #{segmentation_cond_head.3} parent=0 // loop_footer_branch
    %10 = sbr.rel target = $region3
  $region8: #{segmentation_cond_head.3} parent=0 // loop_exit
    _

// kernel: segmentation_cond_head.2
$region0: #{segmentation_cond_head.2}
  #allocation0 [shape = 'u32[]', space=smem, size = 0x4, offset = 0x4, fixed_abs, tag = 'smem constant byte address 0x4 - core index']
  #allocation1 [shape = 'u32[72,128]{1,0:T(1,128)}', space=vmem, size = 0x9000, scoped, tag = 'internal scratch']
  %s0 = inlined_call_operand.vmem [shape: bf16[2,8,256], index: 0, kind: input, shape index: {}]
  %s1 = inlined_call_operand.vmem [shape: bf16[4,8], index: 1, kind: input, shape index: {}]
  %s2 = inlined_call_operand.vmem [shape: f32[4,1], index: 2, kind: input, shape index: {}]
  %s3 = inlined_call_operand.vmem [shape: bf16[3,4], index: 3, kind: input, shape index: {}]
  %s4 = inlined_call_operand.vmem [shape: f32[3,1], index: 4, kind: input, shape index: {}]
  %s5 = inlined_call_operand.vmem [shape: f32[2,3,256], index: 5, kind: output, shape index: {0}]
  %s6 = inlined_call_operand.vmem [shape: f32[2,4,3], index: 6, kind: output, shape index: {1}]
  %7 = xla_tuple %s5, %s6
  %s8 = sld [smem:[#allocation0]]
  $region65: #{segmentation_cond_head.2} parent=0
    _
  %s10 = ssub.s32 1, %s8
  %s11 = scalar_select 0, %s10, %s8
  loop: start=0, step=1, limit=4
  $region2: #{segmentation_cond_head.2} parent=0 // loop_pre_header
    _
  $region3: #{segmentation_cond_head.2} parent=0 // loop_header
    %s13 = sphi 0, %s17
    %p14 = scmp.ge.s32.totalorder %s13, 4
    %s20 = sphi 0, %s32
    %s21 = sphi 0, %s28
    %s22 = sphi 0, %s20
    %s23 = sphi 0, %s21
    %s24 = sphi 0, %s22
    %s25 = sphi 0, %s23
    %s37 = sphi 0, %s39
    %s40 = sphi 0, %s37
    %s41 = sphi 0, %s40
    %s57 = sphi 0, %s41
    %s61 = sphi 0, %s61
    %s63 = sphi 0, %s61
    %s64 = sphi 0, %s63
    %s78 = sphi 0, %s64
    %s82 = sphi 0, %s82
    %s84 = sphi 0, %s82
    %s85 = sphi 0, %s84
    %s99 = sphi 0, %s85
    %s103 = sphi 0, %s103
    %s105 = sphi 0, %s103
    %s106 = sphi 0, %s105
    %s120 = sphi 0, %s106
    %s124 = sphi 0, %s124
    %s126 = sphi 0, %s124
    %s127 = sphi 0, %s126
    %s141 = sphi 0, %s127
    %s149 = sphi 0, %s151
    %s152 = sphi 0, %s149
    %s153 = sphi 0, %s152
    %s169 = sphi 0, %s153
    %s175 = sphi 0, %s177
    %s178 = sphi 0, %s175
    %s179 = sphi 0, %s178
    %s195 = sphi 0, %s179
  $region4: #{segmentation_cond_head.2} parent=0 // loop_header_branch
    %16 = sbr.rel (%p14) target = $region8
  $region5: #{segmentation_cond_head.2} parent=0 // loop_body
    %s18 = ssub.s32 %s13, 1
    %s19 = ssub.s32 %s13, 2
    %s26 = sadd.s32 1, %s21
    %p27 = scmp.ge.s32.totalorder %s26, 1
    %s28 = scalar_select %p27, 0, %s26
    %s29 = sadd.s32 1, %s20
    %s30 = scalar_select %p27, %s29, %s20
    %p31 = scmp.ge.s32.totalorder %s30, 2
    %s32 = scalar_select %p31, 0, %s30
    %s33 = ssub.s32 %s20, %s32
    %s34 = ssub.s32 %s21, %s28
    %s35 = sor.u32 %s33, %s34
    %p36 = scmp.eq.s32.totalorder %s35, 0
    %s38 = sadd.s32 %s37, 1
    %s39 = scalar_select %p36, %s37, %s38
    %p42 = pneg %p36
    %p43 = scmp.eq.s32.totalorder %s13, 1
    %p44 = por %p42, %p43
    %p45 = scmp.ne.s32.totalorder %s37, %s40
    %p46 = scmp.eq.s32.totalorder %s13, 0
    %p47 = por %p45, %p46
    %p48 = scmp.ne.s32.totalorder %s37, %s40
    %p49 = scmp.eq.s32.totalorder %s18, 1
    %p50 = por %p48, %p49
    %p51 = scmp.ne.s32.totalorder %s40, %s41
    %p52 = scmp.eq.s32.totalorder %s18, 0
    %p53 = por %p51, %p52
    %p54 = scmp.ne.s32.totalorder %s40, %s41
    %p55 = scmp.eq.s32.totalorder %s19, 1
    %p56 = por %p54, %p55
    %p58 = scmp.ne.s32.totalorder %s41, %s57
    %p59 = scmp.eq.s32.totalorder %s19, 0
    %p60 = por %p58, %p59
    %s62 = sadd.s32 %s61, 1
    %p65 = scmp.eq.s32.totalorder %s13, 1
    %p66 = scmp.ne.s32.totalorder %s61, %s63
    %p67 = scmp.eq.s32.totalorder %s13, 0
    %p68 = por %p66, %p67
    %p69 = scmp.ne.s32.totalorder %s61, %s63
    %p70 = scmp.eq.s32.totalorder %s18, 1
    %p71 = por %p69, %p70
    %p72 = scmp.ne.s32.totalorder %s63, %s64
    %p73 = scmp.eq.s32.totalorder %s18, 0
    %p74 = por %p72, %p73
    %p75 = scmp.ne.s32.totalorder %s63, %s64
    %p76 = scmp.eq.s32.totalorder %s19, 1
    %p77 = por %p75, %p76
    %p79 = scmp.ne.s32.totalorder %s64, %s78
    %p80 = scmp.eq.s32.totalorder %s19, 0
    %p81 = por %p79, %p80
    %s83 = sadd.s32 %s82, 1
    %p86 = scmp.eq.s32.totalorder %s13, 1
    %p87 = scmp.ne.s32.totalorder %s82, %s84
    %p88 = scmp.eq.s32.totalorder %s13, 0
    %p89 = por %p87, %p88
    %p90 = scmp.ne.s32.totalorder %s82, %s84
    %p91 = scmp.eq.s32.totalorder %s18, 1
    %p92 = por %p90, %p91
    %p93 = scmp.ne.s32.totalorder %s84, %s85
    %p94 = scmp.eq.s32.totalorder %s18, 0
    %p95 = por %p93, %p94
    %p96 = scmp.ne.s32.totalorder %s84, %s85
    %p97 = scmp.eq.s32.totalorder %s19, 1
    %p98 = por %p96, %p97
    %p100 = scmp.ne.s32.totalorder %s85, %s99
    %p101 = scmp.eq.s32.totalorder %s19, 0
    %p102 = por %p100, %p101
    %s104 = sadd.s32 %s103, 1
    %p107 = scmp.eq.s32.totalorder %s13, 1
    %p108 = scmp.ne.s32.totalorder %s103, %s105
    %p109 = scmp.eq.s32.totalorder %s13, 0
    %p110 = por %p108, %p109
    %p111 = scmp.ne.s32.totalorder %s103, %s105
    %p112 = scmp.eq.s32.totalorder %s18, 1
    %p113 = por %p111, %p112
    %p114 = scmp.ne.s32.totalorder %s105, %s106
    %p115 = scmp.eq.s32.totalorder %s18, 0
    %p116 = por %p114, %p115
    %p117 = scmp.ne.s32.totalorder %s105, %s106
    %p118 = scmp.eq.s32.totalorder %s19, 1
    %p119 = por %p117, %p118
    %p121 = scmp.ne.s32.totalorder %s106, %s120
    %p122 = scmp.eq.s32.totalorder %s19, 0
    %p123 = por %p121, %p122
    %s125 = sadd.s32 %s124, 1
    %p128 = scmp.eq.s32.totalorder %s13, 1
    %p129 = scmp.ne.s32.totalorder %s124, %s126
    %p130 = scmp.eq.s32.totalorder %s13, 0
    %p131 = por %p129, %p130
    %p132 = scmp.ne.s32.totalorder %s124, %s126
    %p133 = scmp.eq.s32.totalorder %s18, 1
    %p134 = por %p132, %p133
    %p135 = scmp.ne.s32.totalorder %s126, %s127
    %p136 = scmp.eq.s32.totalorder %s18, 0
    %p137 = por %p135, %p136
    %p138 = scmp.ne.s32.totalorder %s126, %s127
    %p139 = scmp.eq.s32.totalorder %s19, 1
    %p140 = por %p138, %p139
    %p142 = scmp.ne.s32.totalorder %s127, %s141
    %p143 = scmp.eq.s32.totalorder %s19, 0
    %p144 = por %p142, %p143
    %s145 = ssub.s32 %s20, %s32
    %s146 = ssub.s32 %s21, %s28
    %s147 = sor.u32 %s145, %s146
    %p148 = scmp.eq.s32.totalorder %s147, 0
    %s150 = sadd.s32 %s149, 1
    %s151 = scalar_select %p148, %s149, %s150
    %p154 = pneg %p148
    %p155 = scmp.eq.s32.totalorder %s13, 1
    %p156 = por %p154, %p155
    %p157 = scmp.ne.s32.totalorder %s149, %s152
    %p158 = scmp.eq.s32.totalorder %s13, 0
    %p159 = por %p157, %p158
    %p160 = scmp.ne.s32.totalorder %s149, %s152
    %p161 = scmp.eq.s32.totalorder %s18, 1
    %p162 = por %p160, %p161
    %p163 = scmp.ne.s32.totalorder %s152, %s153
    %p164 = scmp.eq.s32.totalorder %s18, 0
    %p165 = por %p163, %p164
    %p166 = scmp.ne.s32.totalorder %s152, %s153
    %p167 = scmp.eq.s32.totalorder %s19, 1
    %p168 = por %p166, %p167
    %p170 = scmp.ne.s32.totalorder %s153, %s169
    %p171 = scmp.eq.s32.totalorder %s19, 0
    %p172 = por %p170, %p171
    %s173 = ssub.s32 %s20, %s32
    %p174 = scmp.eq.s32.totalorder %s173, 0
    %s176 = sadd.s32 %s175, 1
    %s177 = scalar_select %p174, %s175, %s176
    %p180 = pneg %p174
    %p181 = scmp.eq.s32.totalorder %s13, 1
    %p182 = por %p180, %p181
    %p183 = scmp.ne.s32.totalorder %s175, %s178
    %p184 = scmp.eq.s32.totalorder %s13, 0
    %p185 = por %p183, %p184
    %p186 = scmp.ne.s32.totalorder %s175, %s178
    %p187 = scmp.eq.s32.totalorder %s18, 1
    %p188 = por %p186, %p187
    %p189 = scmp.ne.s32.totalorder %s178, %s179
    %p190 = scmp.eq.s32.totalorder %s18, 0
    %p191 = por %p189, %p190
    %p192 = scmp.ne.s32.totalorder %s178, %s179
    %p193 = scmp.eq.s32.totalorder %s19, 1
    %p194 = por %p192, %p193
    %p196 = scmp.ne.s32.totalorder %s179, %s195
    %p197 = scmp.eq.s32.totalorder %s19, 0
    %p198 = por %p196, %p197
    %p199 = scmp.le.s32.totalorder 1, %s13
    %p200 = scmp.lt.s32.totalorder %s13, 3
    %p201 = pnand %p199, %p200
    %p202 = pneg %p201
    // Predicated region
    $region9: #{segmentation_cond_head.2} parent=5 // pred_check
      _
    $region10: #{segmentation_cond_head.2} parent=5 // pred_check_branch
      %204 = sbr.rel (%p201) target = $region12
    $region11: #{segmentation_cond_head.2} parent=5 // pred_region
      %s205 = ssub.s32 %s13, 1
      // Predicated region
      $region13: #{segmentation_cond_head.2} parent=11 // pred_check
        %p206 = pneg %p74
      $region14: #{segmentation_cond_head.2} parent=11 // pred_check_branch
        %208 = sbr.rel (%p206) target = $region16
      $region15: #{segmentation_cond_head.2} parent=11 // pred_region
        _
      $region16: #{segmentation_cond_head.2} parent=11 // pred_fallthru
        _
      // Predicated region
      $region17: #{segmentation_cond_head.2} parent=11 // pred_check
        %p209 = pneg %p95
      $region18: #{segmentation_cond_head.2} parent=11 // pred_check_branch
        %211 = sbr.rel (%p209) target = $region20
      $region19: #{segmentation_cond_head.2} parent=11 // pred_region
        _
      $region20: #{segmentation_cond_head.2} parent=11 // pred_fallthru
        _
      // Predicated region
      $region21: #{segmentation_cond_head.2} parent=11 // pred_check
        %p212 = pneg %p116
      $region22: #{segmentation_cond_head.2} parent=11 // pred_check_branch
        %214 = sbr.rel (%p212) target = $region24
      $region23: #{segmentation_cond_head.2} parent=11 // pred_region
        _
      $region24: #{segmentation_cond_head.2} parent=11 // pred_fallthru
        _
      // Predicated region
      $region25: #{segmentation_cond_head.2} parent=11 // pred_check
        %p215 = pneg %p137
      $region26: #{segmentation_cond_head.2} parent=11 // pred_check_branch
        %217 = sbr.rel (%p215) target = $region28
      $region27: #{segmentation_cond_head.2} parent=11 // pred_region
        _
      $region28: #{segmentation_cond_head.2} parent=11 // pred_fallthru
        _
    $region12: #{segmentation_cond_head.2} parent=5 // pred_fallthru
      _
    %p218 = scmp.lt.s32.totalorder %s13, 2
    // Predicated region
    $region29: #{segmentation_cond_head.2} parent=5 // pred_check
      %p219 = pneg %p218
    $region30: #{segmentation_cond_head.2} parent=5 // pred_check_branch
      %221 = sbr.rel (%p219) target = $region32
    $region31: #{segmentation_cond_head.2} parent=5 // pred_region
      // Predicated region
      $region33: #{segmentation_cond_head.2} parent=31 // pred_check
        %p222 = pneg %p47
      $region34: #{segmentation_cond_head.2} parent=31 // pred_check_branch
        %224 = sbr.rel (%p222) target = $region36
      $region35: #{segmentation_cond_head.2} parent=31 // pred_region
        %s225 = smul.u32 2, %s21
        %p226 = scmp.lt.s32.totalorder %s20, 1
        %s227 = scalar_select %p226, %s20, 1
        %p228 = scmp.lt.s32.totalorder %s225, 1
        %s229 = scalar_select %p228, %s225, 1
        %s230 = smul.addr %s227, 2
        %s231 = sadd.s32 %s229, %s230
        %s232 = smul.addr %s231, 4
        %s233 = scalar_lea.vmem %s0, %s232
        %s234 = smul.u32 2, %s21
      $region36: #{segmentation_cond_head.2} parent=31 // pred_fallthru
        _
    $region32: #{segmentation_cond_head.2} parent=5 // pred_fallthru
      _
    %p235 = scmp.le.s32.totalorder 1, %s13
    %p236 = scmp.lt.s32.totalorder %s13, 3
    %p237 = pnand %p235, %p236
    %p238 = pneg %p237
    // Predicated region
    $region37: #{segmentation_cond_head.2} parent=5 // pred_check
      _
    $region38: #{segmentation_cond_head.2} parent=5 // pred_check_branch
      %240 = sbr.rel (%p237) target = $region40
    $region39: #{segmentation_cond_head.2} parent=5 // pred_region
      %s241 = ssub.s32 %s13, 1
      %s242 = smul.u32 2, %s23
      %p243 = scmp.lt.s32.totalorder %s22, 1
      %s244 = scalar_select %p243, %s22, 1
      %p245 = scmp.lt.s32.totalorder %s242, 1
      %s246 = scalar_select %p245, %s242, 1
      %s247 = smul.addr %s244, 2
      %s248 = sadd.s32 %s246, %s247
      %s249 = smul.addr %s248, 4
      %s250 = scalar_lea.vmem %s0, %s249
      %p251 = pneg %p53
      %p252 = pneg %p50
      %p253 = pneg %p74
      %p254 = pneg %p71
      %p255 = pneg %p95
      %p256 = pneg %p92
      %p257 = pneg %p116
      %p258 = pneg %p113
      %p259 = pneg %p137
      %p260 = pneg %p134
      %p261 = pneg %p165
      %p262 = pneg %p162
      %s263 = smul.u32 2, %s23
      %p264 = scmp.lt.s32.totalorder %s22, 1
      %s265 = scalar_select %p264, %s22, 1
      %p266 = scmp.lt.s32.totalorder %s263, 1
      %s267 = scalar_select %p266, %s263, 1
      %s268 = smul.addr %s265, 2
      %s269 = sadd.s32 %s267, %s268
      %s270 = smul.addr %s269, 4
      %s271 = scalar_lea.vmem %s5, %s270
      %p272 = pneg %p191
      %p273 = pneg %p188
      %p274 = scmp.lt.s32.totalorder %s22, 1
      %s275 = scalar_select %p274, %s22, 1
      %s276 = smul.addr %s275, 4
      %s277 = scalar_lea.vmem %s6, %s276
      %s278 = smul.u32 2, %s23
      %p279 = scmp.lt.s32.totalorder %s22, 1
      %s280 = scalar_select %p279, %s22, 1
      %p281 = scmp.lt.s32.totalorder %s278, 1
      %s282 = scalar_select %p281, %s278, 1
      %s283 = smul.addr %s280, 2
      %s284 = sadd.s32 %s282, %s283
      %s285 = smul.addr %s284, 4
      %s286 = scalar_lea.vmem %s0, %s285
      %s287 = smul.u32 2, %s23
      %s288 = smul.u32 2, %s23
      %p289 = scmp.lt.s32.totalorder %s22, 1
      %s290 = scalar_select %p289, %s22, 1
      %p291 = scmp.lt.s32.totalorder %s288, 1
      %s292 = scalar_select %p291, %s288, 1
      %s293 = smul.addr %s290, 2
      %s294 = sadd.s32 %s292, %s293
      %s295 = smul.addr %s294, 4
      %s296 = scalar_lea.vmem %s5, %s295
      %s297 = smul.u32 2, %s23
      %p298 = scmp.lt.s32.totalorder %s22, 1
      %s299 = scalar_select %p298, %s22, 1
      %s300 = smul.addr %s299, 4
      %s301 = scalar_lea.vmem %s6, %s300
      %v303 = vld [vmem:[%s1] sm:$0x3]
      %v304 = vld [vmem:[%s286] sm:$0xff]
      %v305 = vld [vmem:[%s2] sm:$0xf]
      %307 = vset.pattern.permute.xlu0 0
      %308 = vperm.xlu0 %307, %v305
      %v309 = vpop.permute.xlu0 %308
      %v312 = vunpack.c.l.b16 %v304
      %v313 = vunpack.c.h.b16 %v304
      %v314 = vpack.c.b16 %v312, %v312
      %v315 = vpack.c.b16 %v313, %v313
      %vm316 = vcmask 64512
      %v318 = vsel %vm316, %v303, 0
      %vm320 = vcmask 1043456
      %v322 = vsel %vm320, %v314, 0
      %v325 = vsel %vm320, %v315, 0
      %327 = vmatpush.bf16.msra.mxu0 0
      %328 = vmatpush.bf16.msra.mxu0 0
      %329 = vmatpush.bf16.msra.mxu0 0
      %330 = vmatpush.bf16.msra.mxu0 0
      %331 = vmatpush.bf16.msra.mxu0 0
      %332 = vmatpush.bf16.msra.mxu0 0
      %333 = vmatpush.bf16.msra.mxu0 0
      %334 = vmatpush.bf16.msra.mxu0 %v322
      %335 = vmatmul.bf16.gmra.mxu0 %v318
      %v336 = vpop.f32.mrf.mxu0
      %v337 = vadd.f32 %v309, %v336
      %v338 = vpop.f32.mrf.mxu0
      %339 = vdwg.mxu0
      %340 = vmatpush.bf16.msra.mxu0 0
      %341 = vmatpush.bf16.msra.mxu0 0
      %342 = vmatpush.bf16.msra.mxu0 0
      %343 = vmatpush.bf16.msra.mxu0 0
      %344 = vmatpush.bf16.msra.mxu0 0
      %345 = vmatpush.bf16.msra.mxu0 0
      %346 = vmatpush.bf16.msra.mxu0 0
      %347 = vmatpush.bf16.msra.mxu0 %v325
      %348 = vmatmul.bf16.gmra.mxu0 %v318
      %v349 = vpop.f32.mrf.mxu0
      %v350 = vadd.f32 %v309, %v349
      %v351 = vpop.f32.mrf.mxu0
      %352 = vdwg.mxu0
      %v353 = vmax.f32 %v337, 0.0
      %v354 = vmax.f32 %v350, 0.0
      %v355 = vpack.c.bf16 %v353, %v353
      %v356 = vpack.c.bf16 %v354, %v354
      %v357 = vld [vmem:[%s3] sm:$0x3]
      %v358 = vld [vmem:[%s4] sm:$0x7]
      %360 = vset.pattern.permute.xlu0 0
      %361 = vperm.xlu0 %360, %v358
      %v362 = vpop.permute.xlu0 %361
      %vm364 = vcmask 31744
      %v366 = vsel %vm364, %v357, 0
      %vm368 = vcmask 1041408
      %v370 = vsel %vm368, %v355, 0
      %v373 = vsel %vm368, %v356, 0
      %375 = vmatpush.bf16.msra.mxu0 0
      %376 = vmatpush.bf16.msra.mxu0 0
      %377 = vmatpush.bf16.msra.mxu0 0
      %378 = vmatpush.bf16.msra.mxu0 0
      %379 = vmatpush.bf16.msra.mxu0 0
      %380 = vmatpush.bf16.msra.mxu0 0
      %381 = vmatpush.bf16.msra.mxu0 0
      %382 = vmatpush.bf16.msra.mxu0 %v370
      %383 = vmatmul.bf16.gmra.mxu0 %v366
      %v384 = vpop.f32.mrf.mxu0
      %v385 = vadd.f32 %v362, %v384
      %v386 = vpop.f32.mrf.mxu0
      %387 = vdwg.mxu0
      %388 = vmatpush.bf16.msra.mxu0 0
      %389 = vmatpush.bf16.msra.mxu0 0
      %390 = vmatpush.bf16.msra.mxu0 0
      %391 = vmatpush.bf16.msra.mxu0 0
      %392 = vmatpush.bf16.msra.mxu0 0
      %393 = vmatpush.bf16.msra.mxu0 0
      %394 = vmatpush.bf16.msra.mxu0 0
      %395 = vmatpush.bf16.msra.mxu0 %v373
      %396 = vmatmul.bf16.gmra.mxu0 %v366
      %v397 = vpop.f32.mrf.mxu0
      %v398 = vadd.f32 %v362, %v397
      %v399 = vpop.f32.mrf.mxu0
      %400 = vdwg.mxu0
      %v403 = vrot.slane %v398, 4
      %v404 = vsel %vm320, %v385, %v403
      %406 = vst [vmem:[%s296] sm:$0x77] %v404
      %vm407 = vcmask 1042432
      %v408 = vsel %vm407, %v385, -inf
      %v409 = vrot.slane %v408, 4
      %v410 = vmax.f32 %v408, %v409
      %v411 = vrot.slane %v410, 2
      %v412 = vmax.f32 %v410, %v411
      %v413 = vrot.slane %v412, 1
      %v414 = vmax.f32 %v412, %v413
      %v415 = vsel %vm407, %v398, -inf
      %v416 = vrot.slane %v415, 4
      %v417 = vmax.f32 %v415, %v416
      %v418 = vrot.slane %v417, 2
      %v419 = vmax.f32 %v417, %v418
      %v420 = vrot.slane %v419, 1
      %v421 = vmax.f32 %v419, %v420
      %v422 = vsub.f32 %v385, %v414
      %v423 = vsub.f32 %v398, %v421
      %v424 = vmul.f32 %v422, 1.442695
      %v425 = vpow.pop %v424
      %v426 = vmul.f32 %v423, 1.442695
      %v427 = vpow.pop %v426
      %v428 = vsel %vm407, %v425, 0.0
      %v429 = vrot.slane %v428, 4
      %v430 = vadd.f32 %v428, %v429
      %v431 = vrot.slane %v430, 2
      %v432 = vadd.f32 %v430, %v431
      %v433 = vrot.slane %v432, 1
      %v434 = vadd.f32 %v432, %v433
      %v435 = vsel %vm407, %v427, 0.0
      %v436 = vrot.slane %v435, 4
      %v437 = vadd.f32 %v435, %v436
      %v438 = vrot.slane %v437, 2
      %v439 = vadd.f32 %v437, %v438
      %v440 = vrot.slane %v439, 1
      %v441 = vadd.f32 %v439, %v440
      %v442 = vrcp.pop %v434
      %v443 = vrcp.pop %v441
      %v444 = vmul.f32 %v425, %v442
      %v445 = vmul.f32 %v427, %v443
      %v446 = vpack.c.bf16 %v444, %v444
      %v447 = vpack.c.bf16 %v445, %v445
      %448 = vmatpush.bf16.xpose.msra.mxu0 0
      %449 = vmatpush.bf16.xpose.msra.mxu0 0
      %450 = vmatpush.bf16.xpose.msra.mxu0 0
      %451 = vmatpush.bf16.xpose.msra.mxu0 0
      %452 = vmatpush.bf16.xpose.msra.mxu0 0
      %453 = vmatpush.bf16.xpose.msra.mxu0 0
      %454 = vmatpush.bf16.xpose.msra.mxu0 0
      %455 = vmatpush.bf16.xpose.msra.mxu0 %v446
      %456 = vmatmul.bf16.gmra.mxu0 %v355
      %v457 = vpop.f32.mrf.mxu0
      %v458 = vadd.f32 0.0, %v457
      %v459 = vpop.f32.mrf.mxu0
      %460 = vdwg.mxu0
      %461 = vmatpush.bf16.xpose.msra.mxu0 0
      %462 = vmatpush.bf16.xpose.msra.mxu0 0
      %463 = vmatpush.bf16.xpose.msra.mxu0 0
      %464 = vmatpush.bf16.xpose.msra.mxu0 0
      %465 = vmatpush.bf16.xpose.msra.mxu0 0
      %466 = vmatpush.bf16.xpose.msra.mxu0 0
      %467 = vmatpush.bf16.xpose.msra.mxu0 0
      %468 = vmatpush.bf16.xpose.msra.mxu0 %v447
      %469 = vmatmul.bf16.gmra.mxu0 %v356
      %v470 = vpop.f32.mrf.mxu0
      %v471 = vadd.f32 %v458, %v470
      %v472 = vpop.f32.mrf.mxu0
      %473 = vdwg.mxu0
      %p474 = scmp.eq.s32.totalorder %s23, 0
      // Predicated region
      $region41: #{segmentation_cond_head.2} parent=39 // pred_check
        %p475 = pneg %p474
      $region42: #{segmentation_cond_head.2} parent=39 // pred_check_branch
        %477 = sbr.rel (%p475) target = $region44
      $region43: #{segmentation_cond_head.2} parent=39 // pred_region
        %vm478 = vcmask 19456
        %479 = vst.msk [vmem:[%s301] sm:$0xf] %vm478, 0.0
      $region44: #{segmentation_cond_head.2} parent=39 // pred_fallthru
        _
      %v480 = vld [vmem:[%s301] sm:$0xf]
      %v481 = vadd.f32 %v480, %v471
      %vm482 = vcmask 19456
      %483 = vst.msk [vmem:[%s301] sm:$0xf] %vm482, %v481
      %s484 = smul.u32 2, %s23
      %p485 = scmp.lt.s32.totalorder %s22, 1
      %s486 = scalar_select %p485, %s22, 1
      %p487 = scmp.lt.s32.totalorder %s484, 1
      %s488 = scalar_select %p487, %s484, 1
      %s489 = smul.addr %s486, 2
      %s490 = sadd.s32 %s488, %s489
      %s491 = smul.addr %s490, 4
      %s492 = scalar_lea.vmem %s5, %s491
      %p493 = scmp.lt.s32.totalorder %s22, 1
      %s494 = scalar_select %p493, %s22, 1
      %s495 = smul.addr %s494, 4
      %s496 = scalar_lea.vmem %s6, %s495
      // Predicated region
      $region45: #{segmentation_cond_head.2} parent=39 // pred_check
        %p497 = pneg %p162
      $region46: #{segmentation_cond_head.2} parent=39 // pred_check_branch
        %499 = sbr.rel (%p497) target = $region48
      $region47: #{segmentation_cond_head.2} parent=39 // pred_region
        %s500 = smul.u32 2, %s23
      $region48: #{segmentation_cond_head.2} parent=39 // pred_fallthru
        _
      // Predicated region
      $region49: #{segmentation_cond_head.2} parent=39 // pred_check
        %p501 = pneg %p188
      $region50: #{segmentation_cond_head.2} parent=39 // pred_check_branch
        %503 = sbr.rel (%p501) target = $region52
      $region51: #{segmentation_cond_head.2} parent=39 // pred_region
        _
      $region52: #{segmentation_cond_head.2} parent=39 // pred_fallthru
        _
    $region40: #{segmentation_cond_head.2} parent=5 // pred_fallthru
      _
    %p504 = scmp.le.s32.totalorder 2, %s13
    // Predicated region
    $region53: #{segmentation_cond_head.2} parent=5 // pred_check
      %p505 = pneg %p504
    $region54: #{segmentation_cond_head.2} parent=5 // pred_check_branch
      %507 = sbr.rel (%p505) target = $region56
    $region55: #{segmentation_cond_head.2} parent=5 // pred_region
      %s508 = ssub.s32 %s13, 2
      // Predicated region
      $region57: #{segmentation_cond_head.2} parent=55 // pred_check
        %p509 = pneg %p168
      $region58: #{segmentation_cond_head.2} parent=55 // pred_check_branch
        %511 = sbr.rel (%p509) target = $region60
      $region59: #{segmentation_cond_head.2} parent=55 // pred_region
        %s512 = smul.u32 2, %s25
        %p513 = scmp.lt.s32.totalorder %s24, 1
        %s514 = scalar_select %p513, %s24, 1
        %p515 = scmp.lt.s32.totalorder %s512, 1
        %s516 = scalar_select %p515, %s512, 1
        %s517 = smul.addr %s514, 2
        %s518 = sadd.s32 %s516, %s517
        %s519 = smul.addr %s518, 4
        %s520 = scalar_lea.vmem %s5, %s519
      $region60: #{segmentation_cond_head.2} parent=55 // pred_fallthru
        _
      // Predicated region
      $region61: #{segmentation_cond_head.2} parent=55 // pred_check
        %p521 = pneg %p194
      $region62: #{segmentation_cond_head.2} parent=55 // pred_check_branch
        %523 = sbr.rel (%p521) target = $region64
      $region63: #{segmentation_cond_head.2} parent=55 // pred_region
        %p524 = scmp.lt.s32.totalorder %s24, 1
        %s525 = scalar_select %p524, %s24, 1
        %s526 = smul.addr %s525, 4
        %s527 = scalar_lea.vmem %s6, %s526
      $region64: #{segmentation_cond_head.2} parent=55 // pred_fallthru
        _
    $region56: #{segmentation_cond_head.2} parent=5 // pred_fallthru
      _
  $region6: #{segmentation_cond_head.2} parent=0 // loop_footer
    %s17 = sadd.s32 1, %s13
  $region7: #{segmentation_cond_head.2} parent=0 // loop_footer_branch
    %12 = sbr.rel target = $region3
  $region8: #{segmentation_cond_head.2} parent=0 // loop_exit
    _

</llo_original>
